<compile_context>
chip_gen: v5e
topology: v5e:2x2
jax: 0.10.0
libtpu: 0.0.40
codegen_flags: <defaults>
</compile_context>

<pallas_src>
import jax
import jax.numpy as jnp
from jax.experimental import pallas as pl
from jax.experimental.pallas import tpu as pltpu

NEG_SLOPE = 0.01   # nn.LeakyReLU default negative_slope
LANE = 128
SUBLANE = 8


def _ceil_to(n, m):
    return ((n + m - 1) // m) * m


def _decoder_kernel(x_ref, *refs):
    """Fused decoder for one batch tile.

    refs = (w0, b0, w1, b1, ..., w_{L-1}, b_{L-1}, o_ref).
    All weights / biases are whole tiles resident in VMEM across the batch
    grid; intermediate activations never touch HBM.
    """
    o_ref = refs[-1]
    wb = refs[:-1]
    n_layers = len(wb) // 2

    a = x_ref[...].astype(jnp.float32)
    for li in range(n_layers):
        w = wb[2 * li][...]
        b = wb[2 * li + 1][...]
        a = jnp.where(a >= 0, a, NEG_SLOPE * a)                         # VPU
        a = jnp.dot(a, w, preferred_element_type=jnp.float32) + b      # MXU
    o_ref[...] = a.astype(o_ref.dtype)


def decoder_forward(x, params, *, batch_tile=256):
    """x: (B, hid_size); params: sequence of (w (in,out), b (1,out)) pairs."""
    B, Din = x.shape
    n_features = params[-1][0].shape[1]

    # --- Lane-dense output: pad final layer's out-dim to a multiple of 128. ---
    dout_pad = _ceil_to(n_features, LANE)
    w_last, b_last = params[-1]
    if dout_pad != n_features:
        w_last = jnp.pad(w_last, ((0, 0), (0, dout_pad - n_features)))
        b_last = jnp.pad(b_last, ((0, 0), (0, dout_pad - n_features)))
    layers = list(params[:-1]) + [(w_last, b_last)]

    # --- Batch tiling: one "parallel" grid axis; weights stay VMEM-resident. ---
    tb = min(batch_tile, _ceil_to(B, SUBLANE))
    b_pad = _ceil_to(B, tb)
    if b_pad != B:
        x = jnp.pad(x, ((0, b_pad - B), (0, 0)))
    grid = (b_pad // tb,)

    flat_wb = []
    in_specs = [pl.BlockSpec((tb, Din), lambda i: (i, 0))]
    for w, b in layers:
        flat_wb += [w, b]
        in_specs += [
            pl.BlockSpec(w.shape, lambda i: (0, 0)),   # whole weight, resident
            pl.BlockSpec(b.shape, lambda i: (0, 0)),   # whole bias, resident
        ]

    out = pl.pallas_call(
        _decoder_kernel,
        out_shape=jax.ShapeDtypeStruct((b_pad, dout_pad), x.dtype),
        grid_spec=pl.GridSpec(
            grid=grid,
            in_specs=in_specs,
            out_specs=pl.BlockSpec((tb, dout_pad), lambda i: (i, 0)),
        ),
        compiler_params=pltpu.CompilerParams(
            dimension_semantics=("parallel",)),
    )(x, *flat_wb)

    return out[:B, :n_features]
    # TODO(synk): for non-toy layer widths, cast weights/activations to bf16
    # for the dot on v6e/v7x and budget VMEM tiles vs v7x's 64 MiB.


def init_decoder_params(key, hid_size, n_features, sizes):
    """Deterministic params matching nn.Linear shapes (stored as (in, out))."""
    dims = [hid_size] + list(sizes) + [n_features]
    params = []
    for li, (s_in, s_out) in enumerate(zip(dims[:-1], dims[1:])):
        kw, kb = jax.random.split(jax.random.fold_in(key, li))
        bound = 1.0 / jnp.sqrt(jnp.float32(s_in))   # torch Linear default range
        w = jax.random.uniform(kw, (s_in, s_out), jnp.float32, -bound, bound)
        b = jax.random.uniform(kb, (1, s_out), jnp.float32, -bound, bound)
        params.append((w, b))
    return params


def decoder_forward_ref(x, params):
    out = x
    for w, b in params:
        a = jnp.where(out >= 0, out, NEG_SLOPE * out)
        out = a @ w + b
    return out


if __name__ == "__main__":
    key = jax.random.PRNGKey(0)

    # Small shapes consistent with the module.
    batch = 8
    hid_size = 32
    sizes = [64, 48]
    n_features = 16

    kx, kp = jax.random.split(key)
    x = jax.random.normal(kx, (batch, hid_size), jnp.float32)
    params = init_decoder_params(kp, hid_size, n_features, sizes)

    fwd = jax.jit(decoder_forward)

    out = jax.block_until_ready(fwd(x, params))
    ref = decoder_forward_ref(x, params)
    assert out.shape == (batch, n_features), out.shape
    assert jnp.allclose(out, ref, atol=1e-5, rtol=1e-5), "mismatch vs JAX reference"

    # Ragged batch exercises the pad-and-slice path.
    x2 = jax.random.normal(jax.random.fold_in(kx, 1), (5, hid_size), jnp.float32)
    out2 = jax.block_until_ready(fwd(x2, params))
    ref2 = decoder_forward_ref(x2, params)
    assert out2.shape == (5, n_features), out2.shape
    assert jnp.allclose(out2, ref2, atol=1e-5, rtol=1e-5), "mismatch (ragged batch)"

    print("KERNEL_OK")
</pallas_src>

<mosaic_0001>
module attributes {stable_mosaic.version = 11 : i64} {
  func.func @_decoder_kernel(%arg0: i32, %arg1: memref<8x32xf32, #tpu.memory_space<vmem>>, %arg2: memref<32x64xf32, #tpu.memory_space<vmem>>, %arg3: memref<1x64xf32, #tpu.memory_space<vmem>>, %arg4: memref<64x48xf32, #tpu.memory_space<vmem>>, %arg5: memref<1x48xf32, #tpu.memory_space<vmem>>, %arg6: memref<48x128xf32, #tpu.memory_space<vmem>>, %arg7: memref<1x128xf32, #tpu.memory_space<vmem>>, %arg8: memref<8x128xf32, #tpu.memory_space<vmem>>) attributes {dimension_semantics = [#tpu.dimension_semantics<parallel>], iteration_bounds = array<i64: 1>, scalar_prefetch = 0 : i64, scratch_operands = 0 : i64, tpu.core_type = #tpu.core_type<tc>, window_params = [{transform_indices = @transform_0, window_bounds = array<i64: 8, 32>}, {pipeline_mode = #tpu.pipeline_mode<synchronous>, transform_indices = @transform_1, window_bounds = array<i64: 32, 64>}, {pipeline_mode = #tpu.pipeline_mode<synchronous>, transform_indices = @transform_2, window_bounds = array<i64: 1, 64>}, {pipeline_mode = #tpu.pipeline_mode<synchronous>, transform_indices = @transform_3, window_bounds = array<i64: 64, 48>}, {pipeline_mode = #tpu.pipeline_mode<synchronous>, transform_indices = @transform_4, window_bounds = array<i64: 1, 48>}, {pipeline_mode = #tpu.pipeline_mode<synchronous>, transform_indices = @transform_5, window_bounds = array<i64: 48, 128>}, {pipeline_mode = #tpu.pipeline_mode<synchronous>, transform_indices = @transform_6, window_bounds = array<i64: 1, 128>}, {transform_indices = @transform_7, window_bounds = array<i64: 8, 128>}]} {
    %c0 = arith.constant 0 : index
    %c0_0 = arith.constant 0 : index
    %0 = vector.load %arg1[%c0, %c0_0] : memref<8x32xf32, #tpu.memory_space<vmem>>, vector<8x32xf32>
    %c0_1 = arith.constant 0 : index
    %c0_2 = arith.constant 0 : index
    %1 = vector.load %arg2[%c0_1, %c0_2] : memref<32x64xf32, #tpu.memory_space<vmem>>, vector<32x64xf32>
    %c0_3 = arith.constant 0 : index
    %c0_4 = arith.constant 0 : index
    %2 = vector.load %arg3[%c0_3, %c0_4] : memref<1x64xf32, #tpu.memory_space<vmem>>, vector<1x64xf32>
    %cst = arith.constant 0.000000e+00 : f32
    %3 = vector.broadcast %cst : f32 to vector<8x32xf32>
    %4 = arith.cmpf oge, %0, %3 : vector<8x32xf32>
    %cst_5 = arith.constant 0.00999999977 : f32
    %5 = vector.broadcast %cst_5 : f32 to vector<8x32xf32>
    %6 = arith.mulf %5, %0 : vector<8x32xf32>
    %7 = arith.select %4, %0, %6 : vector<8x32xi1>, vector<8x32xf32>
    %cst_6 = arith.constant dense<0.000000e+00> : vector<8x64xf32>
    %8 = tpu.matmul %7, %1, %cst_6 {dimension_numbers = #tpu.dot_dimension_numbers<[1], [0], [0], [1], [0, 0, 1, 1], [], []>} : vector<8x32xf32>, vector<32x64xf32>, vector<8x64xf32> -> vector<8x64xf32>
    %9 = vector.broadcast %2 : vector<1x64xf32> to vector<8x64xf32>
    %10 = arith.addf %8, %9 : vector<8x64xf32>
    %c0_7 = arith.constant 0 : index
    %c0_8 = arith.constant 0 : index
    %11 = vector.load %arg4[%c0_7, %c0_8] : memref<64x48xf32, #tpu.memory_space<vmem>>, vector<64x48xf32>
    %c0_9 = arith.constant 0 : index
    %c0_10 = arith.constant 0 : index
    %12 = vector.load %arg5[%c0_9, %c0_10] : memref<1x48xf32, #tpu.memory_space<vmem>>, vector<1x48xf32>
    %cst_11 = arith.constant 0.000000e+00 : f32
    %13 = vector.broadcast %cst_11 : f32 to vector<8x64xf32>
    %14 = arith.cmpf oge, %10, %13 : vector<8x64xf32>
    %cst_12 = arith.constant 0.00999999977 : f32
    %15 = vector.broadcast %cst_12 : f32 to vector<8x64xf32>
    %16 = arith.mulf %15, %10 : vector<8x64xf32>
    %17 = arith.select %14, %10, %16 : vector<8x64xi1>, vector<8x64xf32>
    %cst_13 = arith.constant dense<0.000000e+00> : vector<8x48xf32>
    %18 = tpu.matmul %17, %11, %cst_13 {dimension_numbers = #tpu.dot_dimension_numbers<[1], [0], [0], [1], [0, 0, 1, 1], [], []>} : vector<8x64xf32>, vector<64x48xf32>, vector<8x48xf32> -> vector<8x48xf32>
    %19 = vector.broadcast %12 : vector<1x48xf32> to vector<8x48xf32>
    %20 = arith.addf %18, %19 : vector<8x48xf32>
    %c0_14 = arith.constant 0 : index
    %c0_15 = arith.constant 0 : index
    %21 = vector.load %arg6[%c0_14, %c0_15] : memref<48x128xf32, #tpu.memory_space<vmem>>, vector<48x128xf32>
    %c0_16 = arith.constant 0 : index
    %c0_17 = arith.constant 0 : index
    %22 = vector.load %arg7[%c0_16, %c0_17] : memref<1x128xf32, #tpu.memory_space<vmem>>, vector<1x128xf32>
    %cst_18 = arith.constant 0.000000e+00 : f32
    %23 = vector.broadcast %cst_18 : f32 to vector<8x48xf32>
    %24 = arith.cmpf oge, %20, %23 : vector<8x48xf32>
    %cst_19 = arith.constant 0.00999999977 : f32
    %25 = vector.broadcast %cst_19 : f32 to vector<8x48xf32>
    %26 = arith.mulf %25, %20 : vector<8x48xf32>
    %27 = arith.select %24, %20, %26 : vector<8x48xi1>, vector<8x48xf32>
    %cst_20 = arith.constant dense<0.000000e+00> : vector<8x128xf32>
    %28 = tpu.matmul %27, %21, %cst_20 {dimension_numbers = #tpu.dot_dimension_numbers<[1], [0], [0], [1], [0, 0, 1, 1], [], []>} : vector<8x48xf32>, vector<48x128xf32>, vector<8x128xf32> -> vector<8x128xf32>
    %29 = vector.broadcast %22 : vector<1x128xf32> to vector<8x128xf32>
    %30 = arith.addf %28, %29 : vector<8x128xf32>
    %c0_21 = arith.constant 0 : index
    %c0_22 = arith.constant 0 : index
    %31 = vector.load %arg8[%c0_21, %c0_22] : memref<8x128xf32, #tpu.memory_space<vmem>>, vector<8x128xf32>
    tpu.vector_store %arg8[%c0_21, %c0_22], %30 {strides = array<i32>} : memref<8x128xf32, #tpu.memory_space<vmem>>, vector<8x128xf32>,
    return
  }
  func.func @transform_0(%arg0: i32) -> (i32, i32) {
    %c0_i32 = arith.constant 0 : i32
    %c0_i32_0 = arith.constant 0 : i32
    return %arg0, %c0_i32 : i32, i32
  }
  func.func @transform_1(%arg0: i32) -> (i32, i32) {
    %c0_i32 = arith.constant 0 : i32
    %c0_i32_0 = arith.constant 0 : i32
    %c0_i32_1 = arith.constant 0 : i32
    return %c0_i32, %c0_i32_0 : i32, i32
  }
  func.func @transform_2(%arg0: i32) -> (i32, i32) {
    %c0_i32 = arith.constant 0 : i32
    %c0_i32_0 = arith.constant 0 : i32
    %c0_i32_1 = arith.constant 0 : i32
    return %c0_i32, %c0_i32_0 : i32, i32
  }
  func.func @transform_3(%arg0: i32) -> (i32, i32) {
    %c0_i32 = arith.constant 0 : i32
    %c0_i32_0 = arith.constant 0 : i32
    %c0_i32_1 = arith.constant 0 : i32
    return %c0_i32, %c0_i32_0 : i32, i32
  }
  func.func @transform_4(%arg0: i32) -> (i32, i32) {
    %c0_i32 = arith.constant 0 : i32
    %c0_i32_0 = arith.constant 0 : i32
    %c0_i32_1 = arith.constant 0 : i32
    return %c0_i32, %c0_i32_0 : i32, i32
  }
  func.func @transform_5(%arg0: i32) -> (i32, i32) {
    %c0_i32 = arith.constant 0 : i32
    %c0_i32_0 = arith.constant 0 : i32
    %c0_i32_1 = arith.constant 0 : i32
    return %c0_i32, %c0_i32_0 : i32, i32
  }
  func.func @transform_6(%arg0: i32) -> (i32, i32) {
    %c0_i32 = arith.constant 0 : i32
    %c0_i32_0 = arith.constant 0 : i32
    %c0_i32_1 = arith.constant 0 : i32
    return %c0_i32, %c0_i32_0 : i32, i32
  }
  func.func @transform_7(%arg0: i32) -> (i32, i32) {
    %c0_i32 = arith.constant 0 : i32
    %c0_i32_0 = arith.constant 0 : i32
    return %arg0, %c0_i32 : i32, i32
  }
}

</mosaic_0001>

<llo_original>
// kernel: decoder_forward.1
$region0: #{decoder_forward.1}
  #allocation0 [shape = 'u32[]', space=smem, size = 0x4, offset = 0x4, fixed_abs, tag = 'smem constant byte address 0x4 - core index']
  #allocation1 [shape = 'u32[72,128]{1,0:T(1,128)}', space=vmem, size = 0x9000, scoped, tag = 'internal scratch']
  %s0 = inlined_call_operand.vmem [shape: f32[8,32], index: 0, kind: input, shape index: {}]
  %s1 = inlined_call_operand.vmem [shape: f32[32,64], index: 1, kind: input, shape index: {}]
  %s2 = inlined_call_operand.vmem [shape: f32[1,64], index: 2, kind: input, shape index: {}]
  %s3 = inlined_call_operand.vmem [shape: f32[64,48], index: 3, kind: input, shape index: {}]
  %s4 = inlined_call_operand.vmem [shape: f32[1,48], index: 4, kind: input, shape index: {}]
  %s5 = inlined_call_operand.vmem [shape: f32[48,128], index: 5, kind: input, shape index: {}]
  %s6 = inlined_call_operand.vmem [shape: f32[1,128], index: 6, kind: input, shape index: {}]
  %s7 = inlined_call_operand.hbm [shape: f32[8,128], index: 7, kind: output, shape index: {}]
  %s8 = sld [smem:[#allocation0]]
  $region38: #{decoder_forward.1} parent=0
    _
  %s10 = ssub.s32 1, %s8
  %s11 = scalar_select 0, %s10, %s8
  $region1: #{decoder_forward.1} parent=0
    #allocation2 [shape = 'u8[4096]{0}', space=vmem, size = 0x1000, scoped, tag = 'output window, operand 0, single buffered']
    #allocation3 [shape = 's32[1]{0}', space=sflag, size = 0x4, scoped, tag = 'scoped memory for decoder_forward.1']
    %12 = vsyncpa [#allocation3], 0
    // Predicated region
    $region2: #{decoder_forward.1} parent=1 // pred_check
      _
    $region3: #{decoder_forward.1} parent=1 // pred_check_branch
      %14 = sbr.rel (0) target = $region5
    $region4: #{decoder_forward.1} parent=1 // pred_region
      _
    $region5: #{decoder_forward.1} parent=1 // pred_fallthru
      _
    // Predicated region
    $region6: #{decoder_forward.1} parent=1 // pred_check
      _
    $region7: #{decoder_forward.1} parent=1 // pred_check_branch
      %16 = sbr.rel (0) target = $region9
    $region8: #{decoder_forward.1} parent=1 // pred_region
      _
    $region9: #{decoder_forward.1} parent=1 // pred_fallthru
      _
    // Predicated region
    $region10: #{decoder_forward.1} parent=1 // pred_check
      _
    $region11: #{decoder_forward.1} parent=1 // pred_check_branch
      %18 = sbr.rel (0) target = $region13
    $region12: #{decoder_forward.1} parent=1 // pred_region
      _
    $region13: #{decoder_forward.1} parent=1 // pred_fallthru
      _
    // Predicated region
    $region14: #{decoder_forward.1} parent=1 // pred_check
      _
    $region15: #{decoder_forward.1} parent=1 // pred_check_branch
      %20 = sbr.rel (0) target = $region17
    $region16: #{decoder_forward.1} parent=1 // pred_region
      _
    $region17: #{decoder_forward.1} parent=1 // pred_fallthru
      _
    // Predicated region
    $region18: #{decoder_forward.1} parent=1 // pred_check
      _
    $region19: #{decoder_forward.1} parent=1 // pred_check_branch
      %22 = sbr.rel (0) target = $region21
    $region20: #{decoder_forward.1} parent=1 // pred_region
      _
    $region21: #{decoder_forward.1} parent=1 // pred_fallthru
      _
    // Predicated region
    $region22: #{decoder_forward.1} parent=1 // pred_check
      _
    $region23: #{decoder_forward.1} parent=1 // pred_check_branch
      %24 = sbr.rel (0) target = $region25
    $region24: #{decoder_forward.1} parent=1 // pred_region
      _
    $region25: #{decoder_forward.1} parent=1 // pred_fallthru
      _
    // Predicated region
    $region26: #{decoder_forward.1} parent=1 // pred_check
      _
    $region27: #{decoder_forward.1} parent=1 // pred_check_branch
      %26 = sbr.rel (0) target = $region29
    $region28: #{decoder_forward.1} parent=1 // pred_region
      _
    $region29: #{decoder_forward.1} parent=1 // pred_fallthru
      _
    %v27 = vld [vmem:[%s0] sm:$0xff]
    %v28 = vld [vmem:[%s1] sm:$0xff]
    %v29 = vld [vmem:[%s1 + $0x8] sm:$0xff]
    %v30 = vld [vmem:[%s1 + $0x10] sm:$0xff]
    %v31 = vld [vmem:[%s1 + $0x18] sm:$0xff]
    %v32 = vld [vmem:[%s2] sm:$0x1]
    %vm33 = vcmp.ge.f32.partialorder %v27, 0.0
    %v34 = vmul.f32 %v27, 0.01
    %v35 = vsel %vm33, %v27, %v34
    %v37 = vperm.slane %v32, 0
    %vm39 = vcmask 261120
    %v41 = vsel %vm39, %v35, 0
    %43 = vmatpush.msra.mxu0 0.0
    %44 = vmatpush.msra.mxu0 0.0
    %45 = vmatpush.msra.mxu0 0.0
    %46 = vmatpush.msra.mxu0 0.0
    %47 = vmatpush.msra.mxu0 0.0
    %48 = vmatpush.msra.mxu0 0.0
    %49 = vmatpush.msra.mxu0 0.0
    %50 = vmatpush.msra.mxu0 0.0
    %51 = vmatpush.msra.mxu0 0.0
    %52 = vmatpush.msra.mxu0 0.0
    %53 = vmatpush.msra.mxu0 0.0
    %54 = vmatpush.msra.mxu0 0.0
    %55 = vmatpush.msra.mxu0 %v31
    %56 = vmatpush.msra.mxu0 %v30
    %57 = vmatpush.msra.mxu0 %v29
    %58 = vmatpush.msra.mxu0 %v28
    %59 = vmatmul.f32.gmra.mxu0 %v41
    %v60 = vpop.f32.mrf.mxu0
    %v61 = vadd.f32 %v37, %v60
    %62 = vdwg.mxu0
    %v63 = vld [vmem:[%s3] sm:$0xff]
    %v64 = vld [vmem:[%s3 + $0x8] sm:$0xff]
    %v65 = vld [vmem:[%s3 + $0x10] sm:$0xff]
    %v66 = vld [vmem:[%s3 + $0x18] sm:$0xff]
    %v67 = vld [vmem:[%s3 + $0x20] sm:$0xff]
    %v68 = vld [vmem:[%s3 + $0x28] sm:$0xff]
    %v69 = vld [vmem:[%s3 + $0x30] sm:$0xff]
    %v70 = vld [vmem:[%s3 + $0x38] sm:$0xff]
    %v71 = vld [vmem:[%s4] sm:$0x1]
    %vm72 = vcmp.ge.f32.partialorder %v61, 0.0
    %v73 = vmul.f32 %v61, 0.01
    %v74 = vsel %vm72, %v61, %v73
    %v76 = vperm.slane %v71, 0
    %vm78 = vcmask 523264
    %v80 = vsel %vm78, %v74, 0
    %82 = vmatpush.msra.mxu0 0.0
    %83 = vmatpush.msra.mxu0 0.0
    %84 = vmatpush.msra.mxu0 0.0
    %85 = vmatpush.msra.mxu0 0.0
    %86 = vmatpush.msra.mxu0 0.0
    %87 = vmatpush.msra.mxu0 0.0
    %88 = vmatpush.msra.mxu0 0.0
    %89 = vmatpush.msra.mxu0 0.0
    %90 = vmatpush.msra.mxu0 %v70
    %91 = vmatpush.msra.mxu0 %v69
    %92 = vmatpush.msra.mxu0 %v68
    %93 = vmatpush.msra.mxu0 %v67
    %94 = vmatpush.msra.mxu0 %v66
    %95 = vmatpush.msra.mxu0 %v65
    %96 = vmatpush.msra.mxu0 %v64
    %97 = vmatpush.msra.mxu0 %v63
    %98 = vmatmul.f32.gmra.mxu0 %v80
    %v99 = vpop.f32.mrf.mxu0
    %v100 = vadd.f32 %v76, %v99
    %101 = vdwg.mxu0
    %v102 = vld [vmem:[%s5] sm:$0xff]
    %v103 = vld [vmem:[%s5 + $0x8] sm:$0xff]
    %v104 = vld [vmem:[%s5 + $0x10] sm:$0xff]
    %v105 = vld [vmem:[%s5 + $0x18] sm:$0xff]
    %v106 = vld [vmem:[%s5 + $0x20] sm:$0xff]
    %v107 = vld [vmem:[%s5 + $0x28] sm:$0xff]
    %v108 = vld [vmem:[%s6] sm:$0x1]
    %vm109 = vcmp.ge.f32.partialorder %v100, 0.0
    %v110 = vmul.f32 %v100, 0.01
    %v111 = vsel %vm109, %v100, %v110
    %v113 = vperm.slane %v108, 0
    %vm115 = vcmask 392192
    %v117 = vsel %vm115, %v111, 0
    %119 = vmatpush.msra.mxu0 0.0
    %120 = vmatpush.msra.mxu0 0.0
    %121 = vmatpush.msra.mxu0 0.0
    %122 = vmatpush.msra.mxu0 0.0
    %123 = vmatpush.msra.mxu0 0.0
    %124 = vmatpush.msra.mxu0 0.0
    %125 = vmatpush.msra.mxu0 0.0
    %126 = vmatpush.msra.mxu0 0.0
    %127 = vmatpush.msra.mxu0 0.0
    %128 = vmatpush.msra.mxu0 0.0
    %129 = vmatpush.msra.mxu0 %v107
    %130 = vmatpush.msra.mxu0 %v106
    %131 = vmatpush.msra.mxu0 %v105
    %132 = vmatpush.msra.mxu0 %v104
    %133 = vmatpush.msra.mxu0 %v103
    %134 = vmatpush.msra.mxu0 %v102
    %135 = vmatmul.f32.gmra.mxu0 %v117
    %v136 = vpop.f32.mrf.mxu0
    %v137 = vadd.f32 %v113, %v136
    %138 = vdwg.mxu0
    %139 = vst [vmem:[#allocation2] sm:$0xff] %v137
    // Predicated region
    $region30: #{decoder_forward.1} parent=1 // pred_check
      _
    $region31: #{decoder_forward.1} parent=1 // pred_check_branch
      %141 = sbr.rel (0) target = $region33
    $region32: #{decoder_forward.1} parent=1 // pred_region
      %143 = vsyncadd [#allocation3], 0
      %s145 = sshll.u32 [#allocation2], 4
      %s146 = int_to_ptr.vmem [resolvable:$true] %s145
      %s147 = sshll.u32 %s7, 4
      %s148 = int_to_ptr.hbm [resolvable:$true] %s147
      %150 = dma.vmem_to_hbm [thread:$0]  %s146, 128, %s148, [#allocation3]
    $region33: #{decoder_forward.1} parent=1 // pred_fallthru
      _
    // Predicated region
    $region34: #{decoder_forward.1} parent=1 // pred_check
      _
    $region35: #{decoder_forward.1} parent=1 // pred_check_branch
      %152 = sbr.rel (0) target = $region37
    $region36: #{decoder_forward.1} parent=1 // pred_region
      %154 = dma.done [#allocation3], 128
    $region37: #{decoder_forward.1} parent=1 // pred_fallthru
      _
    %155 = vsyncpa [#allocation3], 1

</llo_original>
